<compile_context>
chip_gen: v5e
topology: v5e:2x2
jax: 0.10.0
libtpu: 0.0.40
codegen_flags: <defaults>
</compile_context>

<pallas_src>
import jax
import jax.numpy as jnp
from jax.experimental import pallas as pl
from jax.experimental.pallas import tpu as pltpu

LANE = 128
NEG_INF = -1e30  # additive-mask value; kept in f32 so exp() underflows cleanly to 0


def make_head_kernel(T, seg, compute_dtype):
    """seg = 128-lane-aligned width of each of the V / K / Q segments."""

    def head_kernel(x_ref, w_ref, b_ref, o_ref):
        # x_ref: (1, T, C)      one batch element
        # w_ref: (C, 3*seg)     fused [Wv_pad | Wk_pad | Wq_pad*scale]
        # b_ref: (1, 3*seg)     fused biases (bq pre-scaled)
        # o_ref: (1, T, seg)    lane-dense output (real data in first H columns)
        x = x_ref[0].astype(compute_dtype)            # (T, C)
        w = w_ref[...].astype(compute_dtype)          # (C, 3*seg)

        # One fused projection on the MXU, f32 accumulation.
        qkv = jnp.dot(x, w, preferred_element_type=jnp.float32)   # (T, 3*seg)
        qkv = qkv + b_ref[...].astype(jnp.float32)

        # All slices are 128-lane aligned -> zero-cost views.
        v = qkv[:, 0:seg]                 # (T, seg)  zero-padded past H
        k = qkv[:, seg:2 * seg]           # (T, seg)  zero-padded past H
        q = qkv[:, 2 * seg:3 * seg]       # (T, seg)  zero-padded past H, pre-scaled

        # scores: q @ k^T ('nt' contraction, no materialized transpose).
        # Scale already folded into Wq; padded zero columns contribute nothing.
        s = jax.lax.dot_general(
            q.astype(compute_dtype), k.astype(compute_dtype),
            dimension_numbers=(((1,), (1,)), ((), ())),
            preferred_element_type=jnp.float32)        # (T, T) f32

        # In-kernel causal mask (lower-triangular), f32 additive select.
        row = jax.lax.broadcasted_iota(jnp.int32, (T, T), 0)
        col = jax.lax.broadcasted_iota(jnp.int32, (T, T), 1)
        s = jnp.where(col <= row, s, NEG_INF)

        # Numerically stable softmax in f32; division -> EUP reciprocal-multiply.
        m = jnp.max(s, axis=-1, keepdims=True)
        e = jnp.exp(s - m)
        denom = jnp.sum(e, axis=-1, keepdims=True)
        p = e * pl.reciprocal(denom, approx=True)

        # Weighted sum over V: (T, T) @ (T, seg) -> lane-dense store.
        out = jnp.dot(p.astype(compute_dtype), v.astype(compute_dtype),
                      preferred_element_type=jnp.float32)
        o_ref[0] = out.astype(o_ref.dtype)

    return head_kernel


def fuse_head_params(wk, wq, wv, bk, bq, bv):
    """Init-time (call once) fusion: pad each segment to 128 lanes, fold the
    1/sqrt(head_size) scale into the query weights, concatenate [Wv | Wk | Wq]."""
    C, H = wk.shape
    seg = max(LANE, ((H + LANE - 1) // LANE) * LANE)
    scale = float(H) ** (-0.5)

    def pad_w(w):
        return jnp.zeros((C, seg), w.dtype).at[:, :H].set(w)

    def pad_b(b):
        return jnp.zeros((seg,), b.dtype).at[:H].set(b)

    w_fused = jnp.concatenate(
        [pad_w(wv), pad_w(wk), pad_w(wq * scale)], axis=1)               # (C, 3*seg)
    b_fused = jnp.concatenate(
        [pad_b(bv), pad_b(bk), pad_b(bq * scale)]).reshape(1, 3 * seg)   # (1, 3*seg)
    return w_fused, b_fused


def attention_head(x, w_fused, b_fused, head_size, compute_dtype=jnp.bfloat16):
    """x: (B, T, C); w_fused: (C, 3*seg); b_fused: (1, 3*seg). Returns (B, T, head_size)."""
    B, T, C = x.shape
    seg = w_fused.shape[1] // 3

    kernel = make_head_kernel(T, seg, compute_dtype)

    out_p = pl.pallas_call(
        kernel,
        out_shape=jax.ShapeDtypeStruct((B, T, seg), x.dtype),
        grid=(B,),
        in_specs=[
            pl.BlockSpec((1, T, C), lambda b: (b, 0, 0)),        # per-batch x slab
            pl.BlockSpec((C, 3 * seg), lambda b: (0, 0)),        # fused weights (resident)
            pl.BlockSpec((1, 3 * seg), lambda b: (0, 0)),        # fused biases (resident)
        ],
        out_specs=pl.BlockSpec((1, T, seg), lambda b: (b, 0, 0)),
        compiler_params=pltpu.CompilerParams(
            dimension_semantics=("parallel",)),                  # megacore batch sharding
    )(x, w_fused, b_fused)

    return out_p[:, :, :head_size]


def reference_head(x, wk, wq, wv, bk, bq, bv):
    """Pure-JAX reference replicating the PyTorch forward (eval mode, dropout=0)."""
    k = x @ wk + bk
    q = x @ wq + bq
    v = x @ wv + bv
    scale = k.shape[-1] ** (-0.5)
    wei = jnp.einsum("btj,bsj->bts", q, k) * scale
    T = x.shape[1]
    mask = jnp.tril(jnp.ones((T, T), dtype=bool))
    wei = jnp.where(mask, wei, -jnp.inf)
    wei = jax.nn.softmax(wei, axis=-1)
    return wei @ v


if __name__ == "__main__":
    # config: n_embd=32, n_head=4 -> head_size=8, block_size=8, bias=True, dropout=0.0
    B, T, C = 2, 8, 32
    n_head = 4
    H = C // n_head  # head_size = 8

    key = jax.random.PRNGKey(0)
    kx, kk, kq, kv, kbk, kbq, kbv = jax.random.split(key, 7)

    x = jax.random.normal(kx, (B, T, C), dtype=jnp.float32)
    # nn.Linear(C, H): weight (H, C), applied as x @ W.T -> store transposed (C, H)
    wk = jax.random.normal(kk, (C, H), dtype=jnp.float32) * 0.02
    wq = jax.random.normal(kq, (C, H), dtype=jnp.float32) * 0.02
    wv = jax.random.normal(kv, (C, H), dtype=jnp.float32) * 0.02
    bk = jax.random.normal(kbk, (H,), dtype=jnp.float32) * 0.02
    bq = jax.random.normal(kbq, (H,), dtype=jnp.float32) * 0.02
    bv = jax.random.normal(kbv, (H,), dtype=jnp.float32) * 0.02

    # Init-time parameter fusion (done once, outside the forward path).
    w_fused, b_fused = fuse_head_params(wk, wq, wv, bk, bq, bv)

    ref = reference_head(x, wk, wq, wv, bk, bq, bv)

    # Default path: bf16 MXU operands, f32 accumulation / softmax.
    out = attention_head(x, w_fused, b_fused, H)
    out = jax.block_until_ready(out)
    assert out.shape == (B, T, H), out.shape
    assert jnp.allclose(out, ref, atol=3e-2, rtol=3e-2), (
        float(jnp.max(jnp.abs(out - ref))))

    # Full-f32 path for a tighter correctness check.
    out32 = attention_head(x, w_fused, b_fused, H, compute_dtype=jnp.float32)
    out32 = jax.block_until_ready(out32)
    assert jnp.allclose(out32, ref, atol=5e-3, rtol=5e-3), (
        float(jnp.max(jnp.abs(out32 - ref))))

    print("KERNEL_OK")
</pallas_src>

<mosaic_0001>
module attributes {stable_mosaic.version = 11 : i64} {
  func.func @head_kernel(%arg0: i32, %arg1: memref<1x8x32xf32, #tpu.memory_space<vmem>>, %arg2: memref<32x384xf32, #tpu.memory_space<vmem>>, %arg3: memref<1x384xf32, #tpu.memory_space<vmem>>, %arg4: memref<1x8x128xf32, #tpu.memory_space<vmem>>) attributes {dimension_semantics = [#tpu.dimension_semantics<parallel>], iteration_bounds = array<i64: 2>, scalar_prefetch = 0 : i64, scratch_operands = 0 : i64, tpu.core_type = #tpu.core_type<tc>, window_params = [{transform_indices = @transform_0, window_bounds = array<i64: 1, 8, 32>}, {pipeline_mode = #tpu.pipeline_mode<synchronous>, transform_indices = @transform_1, window_bounds = array<i64: 32, 384>}, {pipeline_mode = #tpu.pipeline_mode<synchronous>, transform_indices = @transform_2, window_bounds = array<i64: 1, 384>}, {transform_indices = @transform_3, window_bounds = array<i64: 1, 8, 128>}]} {
    %c0 = arith.constant 0 : index
    %c0_0 = arith.constant 0 : index
    %c0_1 = arith.constant 0 : index
    %0 = vector.load %arg1[%c0, %c0_0, %c0_1] : memref<1x8x32xf32, #tpu.memory_space<vmem>>, vector<1x8x32xf32>
    %1 = vector.shape_cast %0 : vector<1x8x32xf32> to vector<8x32xf32>
    %2 = arith.truncf %1 : vector<8x32xf32> to vector<8x32xbf16>
    %c0_2 = arith.constant 0 : index
    %c0_3 = arith.constant 0 : index
    %3 = vector.load %arg2[%c0_2, %c0_3] : memref<32x384xf32, #tpu.memory_space<vmem>>, vector<32x384xf32>
    %4 = arith.truncf %3 : vector<32x384xf32> to vector<32x384xbf16>
    %cst = arith.constant dense<0.000000e+00> : vector<8x384xf32>
    %5 = tpu.matmul %2, %4, %cst {dimension_numbers = #tpu.dot_dimension_numbers<[1], [0], [0], [1], [0, 0, 1, 1], [], []>} : vector<8x32xbf16>, vector<32x384xbf16>, vector<8x384xf32> -> vector<8x384xf32>
    %c0_4 = arith.constant 0 : index
    %c0_5 = arith.constant 0 : index
    %6 = vector.load %arg3[%c0_4, %c0_5] : memref<1x384xf32, #tpu.memory_space<vmem>>, vector<1x384xf32>
    %7 = vector.broadcast %6 : vector<1x384xf32> to vector<8x384xf32>
    %8 = arith.addf %5, %7 : vector<8x384xf32>
    %9 = vector.extract_strided_slice %8 {offsets = [0, 0], sizes = [8, 128], strides = [1, 1]} : vector<8x384xf32> to vector<8x128xf32>
    %10 = vector.extract_strided_slice %8 {offsets = [0, 128], sizes = [8, 128], strides = [1, 1]} : vector<8x384xf32> to vector<8x128xf32>
    %11 = vector.extract_strided_slice %8 {offsets = [0, 256], sizes = [8, 128], strides = [1, 1]} : vector<8x384xf32> to vector<8x128xf32>
    %12 = arith.truncf %11 : vector<8x128xf32> to vector<8x128xbf16>
    %13 = arith.truncf %10 : vector<8x128xf32> to vector<8x128xbf16>
    %cst_6 = arith.constant dense<0.000000e+00> : vector<8x8xf32>
    %14 = tpu.matmul %12, %13, %cst_6 {dimension_numbers = #tpu.dot_dimension_numbers<[1], [1], [0], [0], [0, 0, 1, 0], [], []>} : vector<8x128xbf16>, vector<8x128xbf16>, vector<8x8xf32> -> vector<8x8xf32>
    %15 = tpu.iota {dimensions = array<i32: 0>} : vector<8x8xi32>
    %16 = tpu.iota {dimensions = array<i32: 1>} : vector<8x8xi32>
    %17 = arith.cmpi sle, %16, %15 : vector<8x8xi32>
    %cst_7 = arith.constant -1.000000e+30 : f32
    %18 = vector.broadcast %cst_7 : f32 to vector<8x8xf32>
    %19 = arith.select %17, %14, %18 : vector<8x8xi1>, vector<8x8xf32>
    %cst_8 = arith.constant dense<0xFF800000> : vector<8xf32>
    %20 = vector.multi_reduction <maximumf>, %19, %cst_8 [1] : vector<8x8xf32> to vector<8xf32>
    %21 = vector.shape_cast %20 : vector<8xf32> to vector<8x1xf32>
    %22 = vector.broadcast %21 : vector<8x1xf32> to vector<8x8xf32>
    %23 = arith.subf %19, %22 : vector<8x8xf32>
    %24 = math.exp %23 : vector<8x8xf32>
    %cst_9 = arith.constant dense<0.000000e+00> : vector<8xf32>
    %25 = vector.multi_reduction <add>, %24, %cst_9 [1] : vector<8x8xf32> to vector<8xf32>
    %26 = vector.shape_cast %25 : vector<8xf32> to vector<8x1xf32>
    %27 = tpu.reciprocal %26 {approx = true} : vector<8x1xf32> -> vector<8x1xf32>
    %28 = vector.broadcast %27 : vector<8x1xf32> to vector<8x8xf32>
    %29 = arith.mulf %24, %28 : vector<8x8xf32>
    %30 = arith.truncf %29 : vector<8x8xf32> to vector<8x8xbf16>
    %31 = arith.truncf %9 : vector<8x128xf32> to vector<8x128xbf16>
    %cst_10 = arith.constant dense<0.000000e+00> : vector<8x128xf32>
    %32 = tpu.matmul %30, %31, %cst_10 {dimension_numbers = #tpu.dot_dimension_numbers<[1], [0], [0], [1], [0, 0, 1, 1], [], []>} : vector<8x8xbf16>, vector<8x128xbf16>, vector<8x128xf32> -> vector<8x128xf32>
    %c0_11 = arith.constant 0 : index
    %c0_12 = arith.constant 0 : index
    %c0_13 = arith.constant 0 : index
    %33 = vector.load %arg4[%c0_11, %c0_12, %c0_13] : memref<1x8x128xf32, #tpu.memory_space<vmem>>, vector<1x8x128xf32>
    %34 = vector.shape_cast %33 : vector<1x8x128xf32> to vector<8x128xf32>
    %35 = vector.shape_cast %32 : vector<8x128xf32> to vector<1x8x128xf32>
    tpu.vector_store %arg4[%c0_11, %c0_12, %c0_13], %35 {strides = array<i32>} : memref<1x8x128xf32, #tpu.memory_space<vmem>>, vector<1x8x128xf32>,
    return
  }
  func.func @transform_0(%arg0: i32) -> (i32, i32, i32) {
    %c0_i32 = arith.constant 0 : i32
    %c0_i32_0 = arith.constant 0 : i32
    %c0_i32_1 = arith.constant 0 : i32
    return %arg0, %c0_i32, %c0_i32_0 : i32, i32, i32
  }
  func.func @transform_1(%arg0: i32) -> (i32, i32) {
    %c0_i32 = arith.constant 0 : i32
    %c0_i32_0 = arith.constant 0 : i32
    %c0_i32_1 = arith.constant 0 : i32
    return %c0_i32, %c0_i32_0 : i32, i32
  }
  func.func @transform_2(%arg0: i32) -> (i32, i32) {
    %c0_i32 = arith.constant 0 : i32
    %c0_i32_0 = arith.constant 0 : i32
    %c0_i32_1 = arith.constant 0 : i32
    return %c0_i32, %c0_i32_0 : i32, i32
  }
  func.func @transform_3(%arg0: i32) -> (i32, i32, i32) {
    %c0_i32 = arith.constant 0 : i32
    %c0_i32_0 = arith.constant 0 : i32
    %c0_i32_1 = arith.constant 0 : i32
    return %arg0, %c0_i32, %c0_i32_0 : i32, i32, i32
  }
}

</mosaic_0001>

<llo_original>
// kernel: tpu_custom_call.1
$region0: #{tpu_custom_call.1}
  #allocation0 [shape = 'u32[]', space=smem, size = 0x4, offset = 0x4, fixed_abs, tag = 'smem constant byte address 0x4 - core index']
  #allocation1 [shape = 'u32[72,128]{1,0:T(1,128)}', space=vmem, size = 0x9000, scoped, tag = 'internal scratch']
  %s0 = inlined_call_operand.hbm [shape: f32[2,8,32], index: 0, kind: input, shape index: {}]
  %s1 = inlined_call_operand.hbm [shape: f32[32,384], index: 1, kind: input, shape index: {}]
  %s2 = inlined_call_operand.hbm [shape: f32[1,384], index: 2, kind: input, shape index: {}]
  %s3 = inlined_call_operand.hbm [shape: f32[2,8,128], index: 3, kind: output, shape index: {}]
  %s4 = sld [smem:[#allocation0]]
  $region57: #{tpu_custom_call.1} parent=0
    _
  %s6 = ssub.s32 1, %s4
  %s7 = scalar_select 0, %s6, %s4
  $region1: #{tpu_custom_call.1} parent=0
    #allocation2 [shape = 'u8[8192]{0}', space=vmem, size = 0x2000, scoped, tag = 'input window, operand 0']
    #allocation3 [shape = 's32[2]{0}', space=sflag, size = 0x8, scoped, tag = 'scoped memory for tpu_custom_call.1']
    #allocation4 [shape = 's32[2]{0}', space=sflag, size = 0x8, scoped, tag = 'scoped memory for tpu_custom_call.1']
    #allocation5 [shape = 'u8[49152]{0}', space=vmem, size = 0xc000, scoped, tag = 'input window, operand 1, single buffered']
    #allocation6 [shape = 's32[1]{0}', space=sflag, size = 0x4, scoped, tag = 'scoped memory for tpu_custom_call.1']
    #allocation7 [shape = 'u8[1536]{0}', space=vmem, size = 0x800, scoped, tag = 'input window, operand 2, single buffered']
    #allocation8 [shape = 'u8[8192]{0}', space=vmem, size = 0x2000, scoped, tag = 'output window, operand 0']
    %8 = vsyncpa [#allocation3], 0
    %s9 = scalar_lea.sflag [#allocation3], 1
    %10 = vsyncpa %s9, 0
    %11 = vsyncpa [#allocation6], 0
    %12 = vsyncpa [#allocation4], 0
    %s13 = scalar_lea.sflag [#allocation4], 1
    %14 = vsyncpa %s13, 0
    loop: start=0, step=1, limit=4
    $region2: #{tpu_custom_call.1} parent=1 // loop_pre_header
      _
    $region3: #{tpu_custom_call.1} parent=1 // loop_header
      %s16 = sphi 0, %s20
      %p17 = scmp.ge.s32.totalorder %s16, 4
      %s26 = sphi 0, %s28
      %s29 = sphi 0, %s26
      %s30 = sphi 0, %s29
      %s46 = sphi 0, %s30
      %s50 = sphi 0, %s50
      %s52 = sphi 0, %s50
      %s53 = sphi 0, %s52
      %s67 = sphi 0, %s53
      %s71 = sphi 0, %s71
      %s73 = sphi 0, %s71
      %s74 = sphi 0, %s73
      %s88 = sphi 0, %s74
      %s94 = sphi 0, %s96
      %s97 = sphi 0, %s94
      %s98 = sphi 0, %s97
      %s114 = sphi 0, %s98
    $region4: #{tpu_custom_call.1} parent=1 // loop_header_branch
      %19 = sbr.rel (%p17) target = $region8
    $region5: #{tpu_custom_call.1} parent=1 // loop_body
      %s21 = ssub.s32 %s16, 1
      %s22 = ssub.s32 %s16, 2
      %s23 = sadd.s32 %s16, 1
      %s24 = ssub.s32 %s16, %s23
      %p25 = scmp.eq.s32.totalorder %s24, 0
      %s27 = sadd.s32 %s26, 1
      %s28 = scalar_select %p25, %s26, %s27
      %p31 = pneg %p25
      %p32 = scmp.eq.s32.totalorder %s16, 1
      %p33 = por %p31, %p32
      %p34 = scmp.ne.s32.totalorder %s26, %s29
      %p35 = scmp.eq.s32.totalorder %s16, 0
      %p36 = por %p34, %p35
      %p37 = scmp.ne.s32.totalorder %s26, %s29
      %p38 = scmp.eq.s32.totalorder %s21, 1
      %p39 = por %p37, %p38
      %p40 = scmp.ne.s32.totalorder %s29, %s30
      %p41 = scmp.eq.s32.totalorder %s21, 0
      %p42 = por %p40, %p41
      %p43 = scmp.ne.s32.totalorder %s29, %s30
      %p44 = scmp.eq.s32.totalorder %s22, 1
      %p45 = por %p43, %p44
      %p47 = scmp.ne.s32.totalorder %s30, %s46
      %p48 = scmp.eq.s32.totalorder %s22, 0
      %p49 = por %p47, %p48
      %s51 = sadd.s32 %s50, 1
      %p54 = scmp.eq.s32.totalorder %s16, 1
      %p55 = scmp.ne.s32.totalorder %s50, %s52
      %p56 = scmp.eq.s32.totalorder %s16, 0
      %p57 = por %p55, %p56
      %p58 = scmp.ne.s32.totalorder %s50, %s52
      %p59 = scmp.eq.s32.totalorder %s21, 1
      %p60 = por %p58, %p59
      %p61 = scmp.ne.s32.totalorder %s52, %s53
      %p62 = scmp.eq.s32.totalorder %s21, 0
      %p63 = por %p61, %p62
      %p64 = scmp.ne.s32.totalorder %s52, %s53
      %p65 = scmp.eq.s32.totalorder %s22, 1
      %p66 = por %p64, %p65
      %p68 = scmp.ne.s32.totalorder %s53, %s67
      %p69 = scmp.eq.s32.totalorder %s22, 0
      %p70 = por %p68, %p69
      %s72 = sadd.s32 %s71, 1
      %p75 = scmp.eq.s32.totalorder %s16, 1
      %p76 = scmp.ne.s32.totalorder %s71, %s73
      %p77 = scmp.eq.s32.totalorder %s16, 0
      %p78 = por %p76, %p77
      %p79 = scmp.ne.s32.totalorder %s71, %s73
      %p80 = scmp.eq.s32.totalorder %s21, 1
      %p81 = por %p79, %p80
      %p82 = scmp.ne.s32.totalorder %s73, %s74
      %p83 = scmp.eq.s32.totalorder %s21, 0
      %p84 = por %p82, %p83
      %p85 = scmp.ne.s32.totalorder %s73, %s74
      %p86 = scmp.eq.s32.totalorder %s22, 1
      %p87 = por %p85, %p86
      %p89 = scmp.ne.s32.totalorder %s74, %s88
      %p90 = scmp.eq.s32.totalorder %s22, 0
      %p91 = por %p89, %p90
      %s92 = ssub.s32 %s16, %s23
      %p93 = scmp.eq.s32.totalorder %s92, 0
      %s95 = sadd.s32 %s94, 1
      %s96 = scalar_select %p93, %s94, %s95
      %p99 = pneg %p93
      %p100 = scmp.eq.s32.totalorder %s16, 1
      %p101 = por %p99, %p100
      %p102 = scmp.ne.s32.totalorder %s94, %s97
      %p103 = scmp.eq.s32.totalorder %s16, 0
      %p104 = por %p102, %p103
      %p105 = scmp.ne.s32.totalorder %s94, %s97
      %p106 = scmp.eq.s32.totalorder %s21, 1
      %p107 = por %p105, %p106
      %p108 = scmp.ne.s32.totalorder %s97, %s98
      %p109 = scmp.eq.s32.totalorder %s21, 0
      %p110 = por %p108, %p109
      %p111 = scmp.ne.s32.totalorder %s97, %s98
      %p112 = scmp.eq.s32.totalorder %s22, 1
      %p113 = por %p111, %p112
      %p115 = scmp.ne.s32.totalorder %s98, %s114
      %p116 = scmp.eq.s32.totalorder %s22, 0
      %p117 = por %p115, %p116
      %p118 = scmp.le.s32.totalorder 1, %s16
      %p119 = scmp.lt.s32.totalorder %s16, 3
      %p120 = pnand %p118, %p119
      %p121 = pneg %p120
      // Predicated region
      $region9: #{tpu_custom_call.1} parent=5 // pred_check
        _
      $region10: #{tpu_custom_call.1} parent=5 // pred_check_branch
        %123 = sbr.rel (%p120) target = $region12
      $region11: #{tpu_custom_call.1} parent=5 // pred_region
        %s124 = ssub.s32 %s16, 1
        // Predicated region
        $region13: #{tpu_custom_call.1} parent=11 // pred_check
          %p125 = pneg %p63
        $region14: #{tpu_custom_call.1} parent=11 // pred_check_branch
          %127 = sbr.rel (%p125) target = $region16
        $region15: #{tpu_custom_call.1} parent=11 // pred_region
          %129 = vsyncadd [#allocation6], 0
          %s130 = sshll.u32 %s1, 4
          %s131 = int_to_ptr.hbm [resolvable:$true] %s130
          %s132 = sshll.u32 [#allocation5], 4
          %s133 = int_to_ptr.vmem [resolvable:$true] %s132
          %138 = dma.hbm_to_vmem [thread:$0]  %s131, 1536, %s133, [#allocation6], 384, 384, 24
        $region16: #{tpu_custom_call.1} parent=11 // pred_fallthru
          _
        // Predicated region
        $region17: #{tpu_custom_call.1} parent=11 // pred_check
          %p139 = pneg %p84
        $region18: #{tpu_custom_call.1} parent=11 // pred_check_branch
          %141 = sbr.rel (%p139) target = $region20
        $region19: #{tpu_custom_call.1} parent=11 // pred_region
          %143 = vsyncadd [#allocation6], 0
          %s145 = sshll.u32 %s2, 4
          %s146 = int_to_ptr.hbm [resolvable:$true] %s145
          %s147 = sshll.u32 [#allocation7], 4
          %s148 = int_to_ptr.vmem [resolvable:$true] %s147
          %150 = dma.hbm_to_vmem [thread:$0]  %s146, 48, %s148, [#allocation6]
        $region20: #{tpu_custom_call.1} parent=11 // pred_fallthru
          _
      $region12: #{tpu_custom_call.1} parent=5 // pred_fallthru
        _
      %p151 = scmp.lt.s32.totalorder %s16, 2
      // Predicated region
      $region21: #{tpu_custom_call.1} parent=5 // pred_check
        %p152 = pneg %p151
      $region22: #{tpu_custom_call.1} parent=5 // pred_check_branch
        %154 = sbr.rel (%p152) target = $region24
      $region23: #{tpu_custom_call.1} parent=5 // pred_region
        // Predicated region
        $region25: #{tpu_custom_call.1} parent=23 // pred_check
          %p155 = pneg %p36
        $region26: #{tpu_custom_call.1} parent=23 // pred_check_branch
          %157 = sbr.rel (%p155) target = $region28
        $region27: #{tpu_custom_call.1} parent=23 // pred_region
          %s158 = sand.u32 %s26, 1
          %s159 = scalar_lea.sflag [#allocation3], %s158
          %s160 = sand.u32 %s26, 1
          %s161 = smul.addr %s160, 8
          %s162 = scalar_lea.vmem [#allocation2], %s161
          %164 = vsyncadd %s159, 0
          %s165 = smul.addr %s16, 8
          %s166 = scalar_lea.hbm %s0, %s165
          %s168 = sshll.u32 %s166, 4
          %s169 = int_to_ptr.hbm [resolvable:$true] %s168
          %s170 = sshll.u32 %s162, 4
          %s171 = int_to_ptr.vmem [resolvable:$true] %s170
          %173 = dma.hbm_to_vmem [thread:$0]  %s169, 128, %s171, %s159
        $region28: #{tpu_custom_call.1} parent=23 // pred_fallthru
          _
      $region24: #{tpu_custom_call.1} parent=5 // pred_fallthru
        _
      %p174 = scmp.le.s32.totalorder 1, %s16
      %p175 = scmp.lt.s32.totalorder %s16, 3
      %p176 = pnand %p174, %p175
      %p177 = pneg %p176
      // Predicated region
      $region29: #{tpu_custom_call.1} parent=5 // pred_check
        _
      $region30: #{tpu_custom_call.1} parent=5 // pred_check_branch
        %179 = sbr.rel (%p176) target = $region32
      $region31: #{tpu_custom_call.1} parent=5 // pred_region
        %s180 = ssub.s32 %s16, 1
        %s181 = sand.u32 %s29, 1
        %s182 = scalar_lea.sflag [#allocation3], %s181
        %s183 = sand.u32 %s29, 1
        %s184 = smul.addr %s183, 8
        %s185 = scalar_lea.vmem [#allocation2], %s184
        // Predicated region
        $region33: #{tpu_custom_call.1} parent=31 // pred_check
          %p186 = pneg %p42
        $region34: #{tpu_custom_call.1} parent=31 // pred_check_branch
          %188 = sbr.rel (%p186) target = $region36
        $region35: #{tpu_custom_call.1} parent=31 // pred_region
          %190 = dma.done %s182, 128
        $region36: #{tpu_custom_call.1} parent=31 // pred_fallthru
          _
        // Predicated region
        $region37: #{tpu_custom_call.1} parent=31 // pred_check
          %p191 = pneg %p63
        $region38: #{tpu_custom_call.1} parent=31 // pred_check_branch
          %193 = sbr.rel (%p191) target = $region40
        $region39: #{tpu_custom_call.1} parent=31 // pred_region
          %195 = dma.done [#allocation6], 1536
        $region40: #{tpu_custom_call.1} parent=31 // pred_fallthru
          _
        // Predicated region
        $region41: #{tpu_custom_call.1} parent=31 // pred_check
          %p196 = pneg %p84
        $region42: #{tpu_custom_call.1} parent=31 // pred_check_branch
          %198 = sbr.rel (%p196) target = $region44
        $region43: #{tpu_custom_call.1} parent=31 // pred_region
          %200 = dma.done [#allocation6], 48
        $region44: #{tpu_custom_call.1} parent=31 // pred_fallthru
          _
        %s201 = sand.u32 %s29, 1
        %s202 = scalar_lea.sflag [#allocation3], %s201
        %s203 = sand.u32 %s29, 1
        %s204 = smul.addr %s203, 8
        %s205 = scalar_lea.vmem [#allocation2], %s204
        %p206 = pneg %p42
        %p207 = pneg %p39
        %p208 = pneg %p63
        %p209 = pneg %p60
        %p210 = pneg %p84
        %p211 = pneg %p81
        %p212 = pneg %p110
        %p213 = pneg %p107
        %s214 = sand.u32 %s97, 1
        %s215 = scalar_lea.sflag [#allocation4], %s214
        %s216 = sand.u32 %s97, 1
        %s217 = smul.addr %s216, 8
        %s218 = scalar_lea.vmem [#allocation8], %s217
        %v220 = vld [vmem:[%s185] sm:$0xff]
        %v221 = vpack.c.bf16 %v220, %v220
        %v222 = vld [vmem:[#allocation5] sm:$0xff]
        %v223 = vld [vmem:[#allocation5 + $0x8] sm:$0xff]
        %v224 = vld [vmem:[#allocation5 + $0x10] sm:$0xff]
        %v225 = vld [vmem:[#allocation5 + $0x18] sm:$0xff]
        %v226 = vld [vmem:[#allocation5 + $0x20] sm:$0xff]
        %v227 = vld [vmem:[#allocation5 + $0x28] sm:$0xff]
        %v228 = vld [vmem:[#allocation5 + $0x30] sm:$0xff]
        %v229 = vld [vmem:[#allocation5 + $0x38] sm:$0xff]
        %v230 = vld [vmem:[#allocation5 + $0x40] sm:$0xff]
        %v231 = vld [vmem:[#allocation5 + $0x48] sm:$0xff]
        %v232 = vld [vmem:[#allocation5 + $0x50] sm:$0xff]
        %v233 = vld [vmem:[#allocation5 + $0x58] sm:$0xff]
        %v234 = vpack.c.bf16 %v225, %v222
        %v235 = vpack.c.bf16 %v226, %v223
        %v236 = vpack.c.bf16 %v227, %v224
        %v237 = vpack.c.bf16 %v231, %v228
        %v238 = vpack.c.bf16 %v232, %v229
        %v239 = vpack.c.bf16 %v233, %v230
        %v240 = vld [vmem:[#allocation7] sm:$0x7]
        %v242 = vperm.slane %v240, 0
        %v243 = vperm.slane %v240, 1
        %v244 = vperm.slane %v240, 2
        %vm248 = vcmask 261120
        %v250 = vsel %vm248, %v221, 0
        %252 = vmatpush.bf16.msra.mxu0 0
        %253 = vmatpush.bf16.msra.mxu0 0
        %254 = vmatpush.bf16.msra.mxu0 0
        %255 = vmatpush.bf16.msra.mxu0 0
        %256 = vmatpush.bf16.msra.mxu0 0
        %257 = vmatpush.bf16.msra.mxu0 0
        %258 = vmatpush.bf16.msra.mxu0 %v237
        %259 = vmatpush.bf16.msra.mxu0 %v234
        %260 = vmatmul.bf16.gmra.mxu0 %v250
        %v261 = vpop.f32.mrf.mxu0
        %v262 = vadd.f32 %v242, %v261
        %v263 = vpop.f32.mrf.mxu0
        %264 = vdwg.mxu0
        %265 = vmatpush.bf16.msra.mxu0 0
        %266 = vmatpush.bf16.msra.mxu0 0
        %267 = vmatpush.bf16.msra.mxu0 0
        %268 = vmatpush.bf16.msra.mxu0 0
        %269 = vmatpush.bf16.msra.mxu0 0
        %270 = vmatpush.bf16.msra.mxu0 0
        %271 = vmatpush.bf16.msra.mxu0 %v238
        %272 = vmatpush.bf16.msra.mxu0 %v235
        %273 = vmatmul.bf16.gmra.mxu0 %v250
        %v274 = vpop.f32.mrf.mxu0
        %v275 = vadd.f32 %v243, %v274
        %v276 = vpop.f32.mrf.mxu0
        %277 = vdwg.mxu0
        %278 = vmatpush.bf16.msra.mxu0 0
        %279 = vmatpush.bf16.msra.mxu0 0
        %280 = vmatpush.bf16.msra.mxu0 0
        %281 = vmatpush.bf16.msra.mxu0 0
        %282 = vmatpush.bf16.msra.mxu0 0
        %283 = vmatpush.bf16.msra.mxu0 0
        %284 = vmatpush.bf16.msra.mxu0 %v239
        %285 = vmatpush.bf16.msra.mxu0 %v236
        %286 = vmatmul.bf16.gmra.mxu0 %v250
        %v287 = vpop.f32.mrf.mxu0
        %v288 = vadd.f32 %v244, %v287
        %v289 = vpop.f32.mrf.mxu0
        %290 = vdwg.mxu0
        %v291 = vpack.c.bf16 %v288, %v288
        %v292 = vpack.c.bf16 %v275, %v275
        %293 = vmatpush.bf16.xpose.msra.mxu0 0
        %294 = vmatpush.bf16.xpose.msra.mxu0 0
        %295 = vmatpush.bf16.xpose.msra.mxu0 0
        %296 = vmatpush.bf16.xpose.msra.mxu0 0
        %297 = vmatpush.bf16.xpose.msra.mxu0 0
        %298 = vmatpush.bf16.xpose.msra.mxu0 0
        %299 = vmatpush.bf16.xpose.msra.mxu0 0
        %300 = vmatpush.bf16.xpose.msra.mxu0 %v292
        %301 = vmatmul.bf16.gmra.mxu0 %v291
        %v302 = vpop.f32.mrf.mxu0
        %v303 = vadd.f32 0.0, %v302
        %v304 = vpop.f32.mrf.mxu0
        %305 = vdwg.mxu0
        %v306 = vlaneseq
        %v307 = vshrl.u32 %v306, 7
        %v308 = vlaneseq
        %v309 = vand.u32 %v308, 127
        %vm310 = vcmp.le.s32.totalorder %v309, %v307
        %v311 = vsel %vm310, %v303, -1e+30
        %vm312 = vcmask 64512
        %v313 = vsel %vm312, %v311, -inf
        %314 = vmax.xlane.f32.xlu0 %v313
        %v315 = vpop.xlane.xlu0 %314
        %v316 = vsub.f32 %v311, %v315
        %v317 = vmul.f32 %v316, 1.442695
        %v318 = vpow.pop %v317
        %v319 = vsel %vm312, %v318, 0.0
        %320 = vadd.xlane.f32.xlu0 %v319
        %v321 = vpop.xlane.xlu0 %320
        %v322 = vrcp.pop %v321
        %v323 = vmul.f32 %v318, %v322
        %v324 = vpack.c.bf16 %v323, %v323
        %v325 = vpack.c.bf16 %v262, %v262
        %v327 = vsel %vm312, %v324, 0
        %vm329 = vcmask 1043456
        %v331 = vsel %vm329, %v325, 0
        %333 = vmatpush.bf16.msra.mxu0 0
        %334 = vmatpush.bf16.msra.mxu0 0
        %335 = vmatpush.bf16.msra.mxu0 0
        %336 = vmatpush.bf16.msra.mxu0 0
        %337 = vmatpush.bf16.msra.mxu0 0
        %338 = vmatpush.bf16.msra.mxu0 0
        %339 = vmatpush.bf16.msra.mxu0 0
        %340 = vmatpush.bf16.msra.mxu0 %v331
        %341 = vmatmul.bf16.gmra.mxu0 %v327
        %v342 = vpop.f32.mrf.mxu0
        %v343 = vadd.f32 0.0, %v342
        %v344 = vpop.f32.mrf.mxu0
        %345 = vdwg.mxu0
        %346 = vst [vmem:[%s218] sm:$0xff] %v343
        %s347 = sand.u32 %s97, 1
        %s348 = scalar_lea.sflag [#allocation4], %s347
        %s349 = sand.u32 %s97, 1
        %s350 = smul.addr %s349, 8
        %s351 = scalar_lea.vmem [#allocation8], %s350
        // Predicated region
        $region45: #{tpu_custom_call.1} parent=31 // pred_check
          %p352 = pneg %p107
        $region46: #{tpu_custom_call.1} parent=31 // pred_check_branch
          %354 = sbr.rel (%p352) target = $region48
        $region47: #{tpu_custom_call.1} parent=31 // pred_region
          %356 = vsyncadd %s348, 0
          %s357 = smul.addr %s21, 8
          %s358 = scalar_lea.hbm %s3, %s357
          %s360 = sshll.u32 %s351, 4
          %s361 = int_to_ptr.vmem [resolvable:$true] %s360
          %s362 = sshll.u32 %s358, 4
          %s363 = int_to_ptr.hbm [resolvable:$true] %s362
          %365 = dma.vmem_to_hbm [thread:$0]  %s361, 128, %s363, %s348
        $region48: #{tpu_custom_call.1} parent=31 // pred_fallthru
          _
      $region32: #{tpu_custom_call.1} parent=5 // pred_fallthru
        _
      %p366 = scmp.le.s32.totalorder 2, %s16
      // Predicated region
      $region49: #{tpu_custom_call.1} parent=5 // pred_check
        %p367 = pneg %p366
      $region50: #{tpu_custom_call.1} parent=5 // pred_check_branch
        %369 = sbr.rel (%p367) target = $region52
      $region51: #{tpu_custom_call.1} parent=5 // pred_region
        %s370 = ssub.s32 %s16, 2
        // Predicated region
        $region53: #{tpu_custom_call.1} parent=51 // pred_check
          %p371 = pneg %p113
        $region54: #{tpu_custom_call.1} parent=51 // pred_check_branch
          %373 = sbr.rel (%p371) target = $region56
        $region55: #{tpu_custom_call.1} parent=51 // pred_region
          %s374 = sand.u32 %s98, 1
          %s375 = scalar_lea.sflag [#allocation4], %s374
          %s376 = sand.u32 %s98, 1
          %s377 = smul.addr %s376, 8
          %s378 = scalar_lea.vmem [#allocation8], %s377
          %380 = dma.done %s375, 128
        $region56: #{tpu_custom_call.1} parent=51 // pred_fallthru
          _
      $region52: #{tpu_custom_call.1} parent=5 // pred_fallthru
        _
    $region6: #{tpu_custom_call.1} parent=1 // loop_footer
      %s20 = sadd.s32 1, %s16
    $region7: #{tpu_custom_call.1} parent=1 // loop_footer_branch
      %15 = sbr.rel target = $region3
    $region8: #{tpu_custom_call.1} parent=1 // loop_exit
      _
    %381 = vsyncpa [#allocation3], 1
    %s382 = scalar_lea.sflag [#allocation3], 1
    %383 = vsyncpa %s382, 1
    %384 = vsyncpa [#allocation6], 1
    %385 = vsyncpa [#allocation4], 1
    %s386 = scalar_lea.sflag [#allocation4], 1
    %387 = vsyncpa %s386, 1

</llo_original>
